<compile_context>
chip_gen: v5e
topology: v5e:2x2
jax: 0.10.0
libtpu: 0.0.40
codegen_flags: <defaults>
</compile_context>

<pallas_src>
import jax
import jax.numpy as jnp
from jax.experimental import pallas as pl
from jax.experimental.pallas import tpu as pltpu


def projector_kernel(z_ref, w_ref, b_ref, o_ref):
    # z_ref: (TB, ZDp) bf16     packed [x_flat | stats] activations
    # w_ref: (ZDp + n_hidden*LP, LP) bf16   stacked [W1_folded; W2; ...; Wout]
    # b_ref: (n_hidden, LP) f32             stacked biases
    # o_ref: (TB, LP) f32                   lane-dense (padded) output
    zdp = z_ref.shape[-1]
    lp = w_ref.shape[-1]
    n_hidden = b_ref.shape[0]

    h = z_ref[...]                                   # bf16
    off = 0
    in_dim = zdp
    for i in range(n_hidden):                        # static Python loop
        w = w_ref[off:off + in_dim, :]               # 16/128-aligned static slice
        acc = jnp.dot(h, w, preferred_element_type=jnp.float32)
        acc = acc + b_ref[i:i + 1, :]
        h = jnp.maximum(acc, 0.0).astype(jnp.bfloat16)
        off += in_dim
        in_dim = lp
    w_out = w_ref[off:off + lp, :]                   # final Linear, no bias
    o_ref[...] = jnp.dot(h, w_out, preferred_element_type=jnp.float32)


def projector_forward(x, stats, params, *, batch_tile=128, lane_pad=128):
    """x: (B, seq_len, enc_in)  stats: (B, 1, enc_in)  ->  (B, output_dim)"""
    B, C, L = x.shape
    conv_w = params["conv_w"]                        # torch layout: (1, C, K)
    K = conv_w.shape[-1]
    pad = (K - 1) // 2                               # padding=1 for kernel_size=3

    # ---------- glue: fold circular Conv1d into the first Linear ----------
    w1 = params["w1"]                                # (H0, 2L), torch (out, in)
    H0 = w1.shape[0]
    w1a = jnp.transpose(w1[:, :L])                   # (L, H0)  conv half
    w1b = jnp.transpose(w1[:, L:])                   # (L, H0)  stats half
    cw = conv_w[0]                                   # (C, K)
    # conv[b,l] = sum_{c,k} cw[c,k] * x[b,c,(l+k-pad)%L]  =>  conv @ W1a == x_flat @ M
    idx = (jnp.arange(L)[:, None] - jnp.arange(K)[None, :] + pad) % L   # (L, K)
    M = jnp.einsum('ck,lkh->clh', cw, w1a[idx]).reshape(C * L, H0)      # (C*L, H0)
    w1_full = jnp.concatenate([M, w1b], axis=0)      # (C*L + L, H0)

    w2 = jnp.transpose(params["w2"])                 # (H0, H1)
    wo = jnp.transpose(params["wo"])                 # (H1, O)
    b1 = params["b1"]
    b2 = params["b2"]
    H1 = w2.shape[1]
    O = wo.shape[1]

    # ---------- glue: pad everything to a common lane width & pack ----------
    LP = lane_pad * (-(-max(H0, H1, O) // lane_pad))          # 128 here
    ZD = C * L + L
    ZDp = -(-ZD // 16) * 16                                    # bf16 sublane multiple

    def pad2(a, rows, cols):
        return jnp.pad(a, ((0, rows - a.shape[0]), (0, cols - a.shape[1])))

    w_packed = jnp.concatenate(
        [pad2(w1_full, ZDp, LP), pad2(w2, LP, LP), pad2(wo, LP, LP)],
        axis=0,
    ).astype(jnp.bfloat16)                                     # (ZDp + 2*LP, LP)
    b_packed = jnp.stack(
        [jnp.pad(b1, (0, LP - H0)), jnp.pad(b2, (0, LP - H1))]
    ).astype(jnp.float32)                                      # (2, LP)
    n_hidden = b_packed.shape[0]

    # ---------- glue: pack activations, pad batch to a tile multiple ----------
    z = jnp.concatenate([x.reshape(B, C * L), stats.reshape(B, L)], axis=1)
    TB = min(batch_tile, -(-B // 16) * 16)
    Bp = -(-B // TB) * TB
    z = jnp.pad(z, ((0, Bp - B), (0, ZDp - ZD))).astype(jnp.bfloat16)   # (Bp, ZDp)

    w_rows = ZDp + n_hidden * LP
    out = pl.pallas_call(
        projector_kernel,
        out_shape=jax.ShapeDtypeStruct((Bp, LP), jnp.float32),
        grid_spec=pltpu.PrefetchScalarGridSpec(
            num_scalar_prefetch=0,
            grid=(Bp // TB,),
            in_specs=[
                pl.BlockSpec((TB, ZDp), lambda i: (i, 0)),       # batch-tiled acts
                pl.BlockSpec((w_rows, LP), lambda i: (0, 0)),    # resident weights
                pl.BlockSpec((n_hidden, LP), lambda i: (0, 0)),  # resident biases
            ],
            out_specs=pl.BlockSpec((TB, LP), lambda i: (i, 0)),
        ),
        compiler_params=pltpu.CompilerParams(
            dimension_semantics=("parallel",)),
    )(z, w_packed, b_packed)
    return out[:B, :O]


def projector_ref(x, stats, params):
    """Pure-JAX f32 reference mirroring the PyTorch module."""
    B, C, L = x.shape
    cw = params["conv_w"][0]                         # (C, K)
    K = cw.shape[-1]
    pad = (K - 1) // 2
    xpad = jnp.concatenate([x[:, :, L - pad:], x, x[:, :, :pad]], axis=-1)
    conv = jnp.zeros((B, L), jnp.float32)
    for k in range(K):
        conv = conv + jnp.einsum('bcl,c->bl', xpad[:, :, k:k + L], cw[:, k])
    z = jnp.concatenate([conv, stats.reshape(B, L)], axis=-1)
    h = jnp.maximum(z @ params["w1"].T + params["b1"], 0.0)
    h = jnp.maximum(h @ params["w2"].T + params["b2"], 0.0)
    return h @ params["wo"].T


if __name__ == "__main__":
    # Module hyperparameters (small, consistent with the forward pass)
    B, enc_in, seq_len = 2, 16, 8
    hidden_dims = [32, 32]          # hidden_layers = 2
    output_dim = 8
    kernel_size = 3

    key = jax.random.PRNGKey(0)
    ks = jax.random.split(key, 8)

    def uinit(k, shape, fan_in):
        bound = 1.0 / (fan_in ** 0.5)
        return jax.random.uniform(k, shape, jnp.float32, -bound, bound)

    params = {
        # Conv1d weight: (out_channels=1, in_channels=seq_len, kernel_size)
        "conv_w": uinit(ks[0], (1, seq_len, kernel_size), seq_len * kernel_size),
        # Linear weights in torch (out, in) layout
        "w1": uinit(ks[1], (hidden_dims[0], 2 * enc_in), 2 * enc_in),
        "b1": uinit(ks[2], (hidden_dims[0],), 2 * enc_in),
        "w2": uinit(ks[3], (hidden_dims[1], hidden_dims[0]), hidden_dims[0]),
        "b2": uinit(ks[4], (hidden_dims[1],), hidden_dims[0]),
        "wo": uinit(ks[5], (output_dim, hidden_dims[1]), hidden_dims[1]),
    }

    x = jax.random.normal(ks[6], (B, seq_len, enc_in), jnp.float32)
    stats = jax.random.normal(ks[7], (B, 1, enc_in), jnp.float32)

    y = projector_forward(x, stats, params)
    jax.block_until_ready(y)

    y_ref = projector_ref(x, stats, params)
    assert y.shape == (B, output_dim)
    # bf16 matmul inputs (f32 accumulation) -> relaxed tolerance vs f32 reference
    assert jnp.allclose(y, y_ref, atol=2e-2, rtol=2e-2), (y, y_ref)
    print("KERNEL_OK")
</pallas_src>

<mosaic_0001>
module attributes {stable_mosaic.version = 11 : i64} {
  func.func @projector_kernel(%arg0: i32, %arg1: memref<16x144xbf16, #tpu.memory_space<vmem>>, %arg2: memref<400x128xbf16, #tpu.memory_space<vmem>>, %arg3: memref<2x128xf32, #tpu.memory_space<vmem>>, %arg4: memref<16x128xf32, #tpu.memory_space<vmem>>) attributes {dimension_semantics = [#tpu.dimension_semantics<parallel>], iteration_bounds = array<i64: 1>, scalar_prefetch = 0 : i64, scratch_operands = 0 : i64, tpu.core_type = #tpu.core_type<tc>, window_params = [{transform_indices = @transform_0, window_bounds = array<i64: 16, 144>}, {pipeline_mode = #tpu.pipeline_mode<synchronous>, transform_indices = @transform_1, window_bounds = array<i64: 400, 128>}, {pipeline_mode = #tpu.pipeline_mode<synchronous>, transform_indices = @transform_2, window_bounds = array<i64: 2, 128>}, {transform_indices = @transform_3, window_bounds = array<i64: 16, 128>}]} {
    %c0 = arith.constant 0 : index
    %c0_0 = arith.constant 0 : index
    %0 = vector.load %arg1[%c0, %c0_0] : memref<16x144xbf16, #tpu.memory_space<vmem>>, vector<16x144xbf16>
    %c0_1 = arith.constant 0 : index
    %c0_2 = arith.constant 0 : index
    %1 = vector.load %arg2[%c0_1, %c0_2] : memref<400x128xbf16, #tpu.memory_space<vmem>>, vector<144x128xbf16>
    %cst = arith.constant dense<0.000000e+00> : vector<16x128xf32>
    %2 = tpu.matmul %0, %1, %cst {dimension_numbers = #tpu.dot_dimension_numbers<[1], [0], [0], [1], [0, 0, 1, 1], [], []>} : vector<16x144xbf16>, vector<144x128xbf16>, vector<16x128xf32> -> vector<16x128xf32>
    %c0_3 = arith.constant 0 : index
    %c0_4 = arith.constant 0 : index
    %3 = vector.load %arg3[%c0_3, %c0_4] : memref<2x128xf32, #tpu.memory_space<vmem>>, vector<1x128xf32>
    %4 = vector.broadcast %3 : vector<1x128xf32> to vector<16x128xf32>
    %5 = arith.addf %2, %4 : vector<16x128xf32>
    %cst_5 = arith.constant 0.000000e+00 : f32
    %6 = vector.broadcast %cst_5 : f32 to vector<16x128xf32>
    %7 = arith.maximumf %5, %6 : vector<16x128xf32>
    %8 = arith.truncf %7 : vector<16x128xf32> to vector<16x128xbf16>
    %c144 = arith.constant 144 : index
    %c0_6 = arith.constant 0 : index
    %9 = vector.load %arg2[%c144, %c0_6] : memref<400x128xbf16, #tpu.memory_space<vmem>>, vector<128x128xbf16>
    %cst_7 = arith.constant dense<0.000000e+00> : vector<16x128xf32>
    %10 = tpu.matmul %8, %9, %cst_7 {dimension_numbers = #tpu.dot_dimension_numbers<[1], [0], [0], [1], [0, 0, 1, 1], [], []>} : vector<16x128xbf16>, vector<128x128xbf16>, vector<16x128xf32> -> vector<16x128xf32>
    %c1 = arith.constant 1 : index
    %c0_8 = arith.constant 0 : index
    %11 = vector.load %arg3[%c1, %c0_8] : memref<2x128xf32, #tpu.memory_space<vmem>>, vector<1x128xf32>
    %12 = vector.broadcast %11 : vector<1x128xf32> to vector<16x128xf32>
    %13 = arith.addf %10, %12 : vector<16x128xf32>
    %cst_9 = arith.constant 0.000000e+00 : f32
    %14 = vector.broadcast %cst_9 : f32 to vector<16x128xf32>
    %15 = arith.maximumf %13, %14 : vector<16x128xf32>
    %16 = arith.truncf %15 : vector<16x128xf32> to vector<16x128xbf16>
    %c272 = arith.constant 272 : index
    %c0_10 = arith.constant 0 : index
    %17 = vector.load %arg2[%c272, %c0_10] : memref<400x128xbf16, #tpu.memory_space<vmem>>, vector<128x128xbf16>
    %cst_11 = arith.constant dense<0.000000e+00> : vector<16x128xf32>
    %18 = tpu.matmul %16, %17, %cst_11 {dimension_numbers = #tpu.dot_dimension_numbers<[1], [0], [0], [1], [0, 0, 1, 1], [], []>} : vector<16x128xbf16>, vector<128x128xbf16>, vector<16x128xf32> -> vector<16x128xf32>
    %c0_12 = arith.constant 0 : index
    %c0_13 = arith.constant 0 : index
    %19 = vector.load %arg4[%c0_12, %c0_13] : memref<16x128xf32, #tpu.memory_space<vmem>>, vector<16x128xf32>
    tpu.vector_store %arg4[%c0_12, %c0_13], %18 {strides = array<i32>} : memref<16x128xf32, #tpu.memory_space<vmem>>, vector<16x128xf32>,
    return
  }
  func.func @transform_0(%arg0: i32) -> (i32, i32) {
    %c0_i32 = arith.constant 0 : i32
    %c0_i32_0 = arith.constant 0 : i32
    return %arg0, %c0_i32 : i32, i32
  }
  func.func @transform_1(%arg0: i32) -> (i32, i32) {
    %c0_i32 = arith.constant 0 : i32
    %c0_i32_0 = arith.constant 0 : i32
    %c0_i32_1 = arith.constant 0 : i32
    return %c0_i32, %c0_i32_0 : i32, i32
  }
  func.func @transform_2(%arg0: i32) -> (i32, i32) {
    %c0_i32 = arith.constant 0 : i32
    %c0_i32_0 = arith.constant 0 : i32
    %c0_i32_1 = arith.constant 0 : i32
    return %c0_i32, %c0_i32_0 : i32, i32
  }
  func.func @transform_3(%arg0: i32) -> (i32, i32) {
    %c0_i32 = arith.constant 0 : i32
    %c0_i32_0 = arith.constant 0 : i32
    return %arg0, %c0_i32 : i32, i32
  }
}

</mosaic_0001>

<llo_original>
// kernel: tpu_custom_call.1
$region0: #{tpu_custom_call.1}
  #allocation0 [shape = 'u32[]', space=smem, size = 0x4, offset = 0x4, fixed_abs, tag = 'smem constant byte address 0x4 - core index']
  #allocation1 [shape = 'u32[72,128]{1,0:T(1,128)}', space=vmem, size = 0x9000, scoped, tag = 'internal scratch']
  %s0 = inlined_call_operand.hbm [shape: bf16[16,144], index: 0, kind: input, shape index: {}]
  %s1 = inlined_call_operand.hbm [shape: bf16[400,128], index: 1, kind: input, shape index: {}]
  %s2 = inlined_call_operand.hbm [shape: f32[2,128], index: 2, kind: input, shape index: {}]
  %s3 = inlined_call_operand.hbm [shape: f32[16,128], index: 3, kind: output, shape index: {}]
  %s4 = sld [smem:[#allocation0]]
  $region34: #{tpu_custom_call.1} parent=0
    _
  %s6 = ssub.s32 1, %s4
  %s7 = scalar_select 0, %s6, %s4
  $region1: #{tpu_custom_call.1} parent=0
    #allocation2 [shape = 'u8[8192]{0}', space=vmem, size = 0x2000, scoped, tag = 'input window, operand 0, single buffered']
    #allocation3 [shape = 's32[1]{0}', space=sflag, size = 0x4, scoped, tag = 'scoped memory for tpu_custom_call.1']
    #allocation4 [shape = 's32[1]{0}', space=sflag, size = 0x4, scoped, tag = 'scoped memory for tpu_custom_call.1']
    #allocation5 [shape = 'u8[102400]{0}', space=vmem, size = 0x19000, scoped, tag = 'input window, operand 1, single buffered']
    #allocation6 [shape = 's32[1]{0}', space=sflag, size = 0x4, scoped, tag = 'scoped memory for tpu_custom_call.1']
    #allocation7 [shape = 'u8[1024]{0}', space=vmem, size = 0x400, scoped, tag = 'input window, operand 2, single buffered']
    #allocation8 [shape = 'u8[8192]{0}', space=vmem, size = 0x2000, scoped, tag = 'output window, operand 0, single buffered']
    %8 = vsyncpa [#allocation3], 0
    %9 = vsyncpa [#allocation6], 0
    %10 = vsyncpa [#allocation4], 0
    // Predicated region
    $region2: #{tpu_custom_call.1} parent=1 // pred_check
      _
    $region3: #{tpu_custom_call.1} parent=1 // pred_check_branch
      %12 = sbr.rel (0) target = $region5
    $region4: #{tpu_custom_call.1} parent=1 // pred_region
      %14 = vsyncadd [#allocation3], 0
      %s15 = sshll.u32 %s0, 4
      %s16 = int_to_ptr.hbm [resolvable:$true] %s15
      %s17 = sshll.u32 [#allocation2], 4
      %s18 = int_to_ptr.vmem [resolvable:$true] %s17
      %23 = dma.hbm_to_vmem [thread:$0]  %s16, 256, %s18, [#allocation3], 128, 128, 8
    $region5: #{tpu_custom_call.1} parent=1 // pred_fallthru
      _
    // Predicated region
    $region6: #{tpu_custom_call.1} parent=1 // pred_check
      _
    $region7: #{tpu_custom_call.1} parent=1 // pred_check_branch
      %25 = sbr.rel (0) target = $region9
    $region8: #{tpu_custom_call.1} parent=1 // pred_region
      %27 = vsyncadd [#allocation6], 0
      %s28 = sshll.u32 %s1, 4
      %s29 = int_to_ptr.hbm [resolvable:$true] %s28
      %s30 = sshll.u32 [#allocation5], 4
      %s31 = int_to_ptr.vmem [resolvable:$true] %s30
      %36 = dma.hbm_to_vmem [thread:$0]  %s29, 3200, %s31, [#allocation6], 64, 64, 4
    $region9: #{tpu_custom_call.1} parent=1 // pred_fallthru
      _
    // Predicated region
    $region10: #{tpu_custom_call.1} parent=1 // pred_check
      _
    $region11: #{tpu_custom_call.1} parent=1 // pred_check_branch
      %38 = sbr.rel (0) target = $region13
    $region12: #{tpu_custom_call.1} parent=1 // pred_region
      %40 = vsyncadd [#allocation6], 0
      %s42 = sshll.u32 %s2, 4
      %s43 = int_to_ptr.hbm [resolvable:$true] %s42
      %s44 = sshll.u32 [#allocation7], 4
      %s45 = int_to_ptr.vmem [resolvable:$true] %s44
      %47 = dma.hbm_to_vmem [thread:$0]  %s43, 32, %s45, [#allocation6]
    $region13: #{tpu_custom_call.1} parent=1 // pred_fallthru
      _
    // Predicated region
    $region14: #{tpu_custom_call.1} parent=1 // pred_check
      _
    $region15: #{tpu_custom_call.1} parent=1 // pred_check_branch
      %49 = sbr.rel (0) target = $region17
    $region16: #{tpu_custom_call.1} parent=1 // pred_region
      %51 = dma.done [#allocation3], 256
    $region17: #{tpu_custom_call.1} parent=1 // pred_fallthru
      _
    // Predicated region
    $region18: #{tpu_custom_call.1} parent=1 // pred_check
      _
    $region19: #{tpu_custom_call.1} parent=1 // pred_check_branch
      %53 = sbr.rel (0) target = $region21
    $region20: #{tpu_custom_call.1} parent=1 // pred_region
      %55 = dma.done [#allocation6], 3200
    $region21: #{tpu_custom_call.1} parent=1 // pred_fallthru
      _
    // Predicated region
    $region22: #{tpu_custom_call.1} parent=1 // pred_check
      _
    $region23: #{tpu_custom_call.1} parent=1 // pred_check_branch
      %57 = sbr.rel (0) target = $region25
    $region24: #{tpu_custom_call.1} parent=1 // pred_region
      %59 = dma.done [#allocation6], 32
    $region25: #{tpu_custom_call.1} parent=1 // pred_fallthru
      _
    %v61 = vld [vmem:[#allocation2] sm:$0xff]
    %v62 = vld [vmem:[#allocation2 + $0x8] sm:$0xff]
    %v63 = vld [vmem:[#allocation5] sm:$0xf]
    %v64 = vld [vmem:[#allocation5 + $0x4] sm:$0xf]
    %v65 = vld [vmem:[#allocation5 + $0x8] sm:$0xf]
    %v66 = vld [vmem:[#allocation5 + $0xc] sm:$0xf]
    %v67 = vld [vmem:[#allocation5 + $0x10] sm:$0xf]
    %v68 = vld [vmem:[#allocation5 + $0x14] sm:$0xf]
    %v69 = vld [vmem:[#allocation5 + $0x18] sm:$0xf]
    %v70 = vld [vmem:[#allocation5 + $0x1c] sm:$0xf]
    %v71 = vld [vmem:[#allocation5 + $0x20] sm:$0xf]
    %v72 = vld [vmem:[#allocation5 + $0x24] sm:$0xf]
    %v73 = vld [vmem:[#allocation5 + $0x28] sm:$0xf]
    %v74 = vld [vmem:[#allocation5 + $0x2c] sm:$0xf]
    %v75 = vld [vmem:[#allocation5 + $0x30] sm:$0xf]
    %v76 = vld [vmem:[#allocation5 + $0x34] sm:$0xf]
    %v77 = vld [vmem:[#allocation5 + $0x38] sm:$0xf]
    %v78 = vld [vmem:[#allocation5 + $0x3c] sm:$0xf]
    %v79 = vld [vmem:[#allocation5 + $0x40] sm:$0xf]
    %v80 = vld [vmem:[#allocation5 + $0x44] sm:$0xf]
    %v81 = vld [vmem:[#allocation7] sm:$0x1]
    %v82 = vperm.slane %v81, 0
    %v85 = vunpack.c.l.b16 %v61
    %v86 = vunpack.c.h.b16 %v61
    %v87 = vunpack.c.l.b16 %v62
    %v88 = vunpack.c.h.b16 %v62
    %v89 = vpack.c.b16 %v87, %v85
    %v90 = vpack.c.b16 %v88, %v86
    %v110 = vunpack.c.l.b16 %v63
    %v111 = vunpack.c.l.b16 %v64
    %v112 = vunpack.c.l.b16 %v65
    %v113 = vunpack.c.l.b16 %v66
    %v114 = vunpack.c.l.b16 %v67
    %v115 = vunpack.c.l.b16 %v68
    %v116 = vunpack.c.l.b16 %v69
    %v117 = vunpack.c.l.b16 %v70
    %v118 = vunpack.c.l.b16 %v71
    %v119 = vunpack.c.l.b16 %v72
    %v120 = vunpack.c.l.b16 %v73
    %v121 = vunpack.c.l.b16 %v74
    %v122 = vunpack.c.l.b16 %v75
    %v123 = vunpack.c.l.b16 %v76
    %v124 = vunpack.c.l.b16 %v77
    %v125 = vunpack.c.l.b16 %v78
    %v126 = vunpack.c.l.b16 %v79
    %v127 = vunpack.c.l.b16 %v80
    %v128 = vpack.c.b16 %v111, %v110
    %v129 = vpack.c.b16 %v113, %v112
    %v130 = vpack.c.b16 %v115, %v114
    %v131 = vpack.c.b16 %v117, %v116
    %v132 = vpack.c.b16 %v119, %v118
    %v133 = vpack.c.b16 %v121, %v120
    %v134 = vpack.c.b16 %v123, %v122
    %v135 = vpack.c.b16 %v125, %v124
    %v136 = vpack.c.b16 %v127, %v126
    %vm146 = vcmask 130048
    %v148 = vsel %vm146, %v90, 0
    %150 = vmatpush.bf16.msra.mxu0 %v135
    %151 = vmatpush.bf16.msra.mxu0 %v134
    %152 = vmatpush.bf16.msra.mxu0 %v133
    %153 = vmatpush.bf16.msra.mxu0 %v132
    %154 = vmatpush.bf16.msra.mxu0 %v131
    %155 = vmatpush.bf16.msra.mxu0 %v130
    %156 = vmatpush.bf16.msra.mxu0 %v129
    %157 = vmatpush.bf16.msra.mxu0 %v128
    %158 = vmatmul.bf16.gmra.mxu0 %v89
    %v159 = vpop.f32.mrf.mxu0
    %v160 = vadd.f32 %v82, %v159
    %v161 = vpop.f32.mrf.mxu0
    %v162 = vadd.f32 %v82, %v161
    %163 = vdwg.mxu0
    %164 = vmatpush.bf16.msra.mxu0 0
    %165 = vmatpush.bf16.msra.mxu0 0
    %166 = vmatpush.bf16.msra.mxu0 0
    %167 = vmatpush.bf16.msra.mxu0 0
    %168 = vmatpush.bf16.msra.mxu0 0
    %169 = vmatpush.bf16.msra.mxu0 0
    %170 = vmatpush.bf16.msra.mxu0 0
    %171 = vmatpush.bf16.msra.mxu0 %v136
    %172 = vmatmul.bf16.gmra.mxu0 %v148
    %v173 = vpop.f32.mrf.mxu0
    %v174 = vadd.f32 %v160, %v173
    %v175 = vpop.f32.mrf.mxu0
    %v176 = vadd.f32 %v162, %v175
    %177 = vdwg.mxu0
    %v178 = vmax.f32 %v174, 0.0
    %v179 = vmax.f32 %v176, 0.0
    %v180 = vpack.c.bf16 %v179, %v178
    %v181 = vld [vmem:[#allocation5 + $0x48] sm:$0xf]
    %v182 = vld [vmem:[#allocation5 + $0x4c] sm:$0xf]
    %v183 = vld [vmem:[#allocation5 + $0x50] sm:$0xf]
    %v184 = vld [vmem:[#allocation5 + $0x54] sm:$0xf]
    %v185 = vld [vmem:[#allocation5 + $0x58] sm:$0xf]
    %v186 = vld [vmem:[#allocation5 + $0x5c] sm:$0xf]
    %v187 = vld [vmem:[#allocation5 + $0x60] sm:$0xf]
    %v188 = vld [vmem:[#allocation5 + $0x64] sm:$0xf]
    %v189 = vld [vmem:[#allocation5 + $0x68] sm:$0xf]
    %v190 = vld [vmem:[#allocation5 + $0x6c] sm:$0xf]
    %v191 = vld [vmem:[#allocation5 + $0x70] sm:$0xf]
    %v192 = vld [vmem:[#allocation5 + $0x74] sm:$0xf]
    %v193 = vld [vmem:[#allocation5 + $0x78] sm:$0xf]
    %v194 = vld [vmem:[#allocation5 + $0x7c] sm:$0xf]
    %v195 = vld [vmem:[#allocation5 + $0x80] sm:$0xf]
    %v196 = vld [vmem:[#allocation5 + $0x84] sm:$0xf]
    %v197 = vld [vmem:[#allocation7 + $0x1] sm:$0x1]
    %v198 = vperm.slane %v197, 0
    %v215 = vunpack.c.l.b16 %v181
    %v216 = vunpack.c.l.b16 %v182
    %v217 = vunpack.c.l.b16 %v183
    %v218 = vunpack.c.l.b16 %v184
    %v219 = vunpack.c.l.b16 %v185
    %v220 = vunpack.c.l.b16 %v186
    %v221 = vunpack.c.l.b16 %v187
    %v222 = vunpack.c.l.b16 %v188
    %v223 = vunpack.c.l.b16 %v189
    %v224 = vunpack.c.l.b16 %v190
    %v225 = vunpack.c.l.b16 %v191
    %v226 = vunpack.c.l.b16 %v192
    %v227 = vunpack.c.l.b16 %v193
    %v228 = vunpack.c.l.b16 %v194
    %v229 = vunpack.c.l.b16 %v195
    %v230 = vunpack.c.l.b16 %v196
    %v231 = vpack.c.b16 %v216, %v215
    %v232 = vpack.c.b16 %v218, %v217
    %v233 = vpack.c.b16 %v220, %v219
    %v234 = vpack.c.b16 %v222, %v221
    %v235 = vpack.c.b16 %v224, %v223
    %v236 = vpack.c.b16 %v226, %v225
    %v237 = vpack.c.b16 %v228, %v227
    %v238 = vpack.c.b16 %v230, %v229
    %247 = vmatpush.bf16.msra.mxu0 %v238
    %248 = vmatpush.bf16.msra.mxu0 %v237
    %249 = vmatpush.bf16.msra.mxu0 %v236
    %250 = vmatpush.bf16.msra.mxu0 %v235
    %251 = vmatpush.bf16.msra.mxu0 %v234
    %252 = vmatpush.bf16.msra.mxu0 %v233
    %253 = vmatpush.bf16.msra.mxu0 %v232
    %254 = vmatpush.bf16.msra.mxu0 %v231
    %255 = vmatmul.bf16.gmra.mxu0 %v180
    %v256 = vpop.f32.mrf.mxu0
    %v257 = vadd.f32 %v198, %v256
    %v258 = vpop.f32.mrf.mxu0
    %v259 = vadd.f32 %v198, %v258
    %260 = vdwg.mxu0
    %v261 = vmax.f32 %v257, 0.0
    %v262 = vmax.f32 %v259, 0.0
    %v263 = vpack.c.bf16 %v262, %v261
    %v264 = vld [vmem:[#allocation5 + $0x88] sm:$0xf]
    %v265 = vld [vmem:[#allocation5 + $0x8c] sm:$0xf]
    %v266 = vld [vmem:[#allocation5 + $0x90] sm:$0xf]
    %v267 = vld [vmem:[#allocation5 + $0x94] sm:$0xf]
    %v268 = vld [vmem:[#allocation5 + $0x98] sm:$0xf]
    %v269 = vld [vmem:[#allocation5 + $0x9c] sm:$0xf]
    %v270 = vld [vmem:[#allocation5 + $0xa0] sm:$0xf]
    %v271 = vld [vmem:[#allocation5 + $0xa4] sm:$0xf]
    %v272 = vld [vmem:[#allocation5 + $0xa8] sm:$0xf]
    %v273 = vld [vmem:[#allocation5 + $0xac] sm:$0xf]
    %v274 = vld [vmem:[#allocation5 + $0xb0] sm:$0xf]
    %v275 = vld [vmem:[#allocation5 + $0xb4] sm:$0xf]
    %v276 = vld [vmem:[#allocation5 + $0xb8] sm:$0xf]
    %v277 = vld [vmem:[#allocation5 + $0xbc] sm:$0xf]
    %v278 = vld [vmem:[#allocation5 + $0xc0] sm:$0xf]
    %v279 = vld [vmem:[#allocation5 + $0xc4] sm:$0xf]
    %v296 = vunpack.c.l.b16 %v264
    %v297 = vunpack.c.l.b16 %v265
    %v298 = vunpack.c.l.b16 %v266
    %v299 = vunpack.c.l.b16 %v267
    %v300 = vunpack.c.l.b16 %v268
    %v301 = vunpack.c.l.b16 %v269
    %v302 = vunpack.c.l.b16 %v270
    %v303 = vunpack.c.l.b16 %v271
    %v304 = vunpack.c.l.b16 %v272
    %v305 = vunpack.c.l.b16 %v273
    %v306 = vunpack.c.l.b16 %v274
    %v307 = vunpack.c.l.b16 %v275
    %v308 = vunpack.c.l.b16 %v276
    %v309 = vunpack.c.l.b16 %v277
    %v310 = vunpack.c.l.b16 %v278
    %v311 = vunpack.c.l.b16 %v279
    %v312 = vpack.c.b16 %v297, %v296
    %v313 = vpack.c.b16 %v299, %v298
    %v314 = vpack.c.b16 %v301, %v300
    %v315 = vpack.c.b16 %v303, %v302
    %v316 = vpack.c.b16 %v305, %v304
    %v317 = vpack.c.b16 %v307, %v306
    %v318 = vpack.c.b16 %v309, %v308
    %v319 = vpack.c.b16 %v311, %v310
    %328 = vmatpush.bf16.msra.mxu0 %v319
    %329 = vmatpush.bf16.msra.mxu0 %v318
    %330 = vmatpush.bf16.msra.mxu0 %v317
    %331 = vmatpush.bf16.msra.mxu0 %v316
    %332 = vmatpush.bf16.msra.mxu0 %v315
    %333 = vmatpush.bf16.msra.mxu0 %v314
    %334 = vmatpush.bf16.msra.mxu0 %v313
    %335 = vmatpush.bf16.msra.mxu0 %v312
    %336 = vmatmul.bf16.gmra.mxu0 %v263
    %v337 = vpop.f32.mrf.mxu0
    %v338 = vadd.f32 0.0, %v337
    %v339 = vpop.f32.mrf.mxu0
    %v340 = vadd.f32 0.0, %v339
    %341 = vdwg.mxu0
    %342 = vst [vmem:[#allocation8] sm:$0xff] %v338
    %343 = vst [vmem:[#allocation8 + $0x8] sm:$0xff] %v340
    // Predicated region
    $region26: #{tpu_custom_call.1} parent=1 // pred_check
      _
    $region27: #{tpu_custom_call.1} parent=1 // pred_check_branch
      %345 = sbr.rel (0) target = $region29
    $region28: #{tpu_custom_call.1} parent=1 // pred_region
      %347 = vsyncadd [#allocation4], 0
      %s348 = sshll.u32 [#allocation8], 4
      %s349 = int_to_ptr.vmem [resolvable:$true] %s348
      %s350 = sshll.u32 %s3, 4
      %s351 = int_to_ptr.hbm [resolvable:$true] %s350
      %356 = dma.vmem_to_hbm [thread:$0]  %s349, 256, %s351, [#allocation4], 128, 128, 8
    $region29: #{tpu_custom_call.1} parent=1 // pred_fallthru
      _
    // Predicated region
    $region30: #{tpu_custom_call.1} parent=1 // pred_check
      _
    $region31: #{tpu_custom_call.1} parent=1 // pred_check_branch
      %358 = sbr.rel (0) target = $region33
    $region32: #{tpu_custom_call.1} parent=1 // pred_region
      %360 = dma.done [#allocation4], 256
    $region33: #{tpu_custom_call.1} parent=1 // pred_fallthru
      _
    %361 = vsyncpa [#allocation3], 1
    %362 = vsyncpa [#allocation6], 1
    %363 = vsyncpa [#allocation4], 1

</llo_original>
